<compile_context>
chip_gen: v5e
topology: v5e:2x2
jax: 0.10.0
libtpu: 0.0.40
codegen_flags: <defaults>
</compile_context>

<pallas_src>
import functools

import jax
import jax.numpy as jnp
from jax.experimental import pallas as pl
from jax.experimental.pallas import tpu as pltpu


def _round_up(x, m):
    return (x + m - 1) // m * m


def fc_decoder_kernel(hs_ref, w1_ref, b1_ref, w2_ref, b2_ref, o_ref):
    """Grid = (batch_tiles,).

    hs_ref : (seq, tile_b, dff)   bf16  current batch tile of the activations
    w1_ref : (seq, dff, hidden)   bf16  whole W1, VMEM-resident (constant index)
    b1_ref : (1, hidden)          f32
    w2_ref : (hidden, ncls_pad)   bf16  VMEM-resident
    b2_ref : (1, ncls_pad)        f32
    o_ref  : (tile_b, ncls_pad)   f32   lane-dense output slab
    """
    seq = hs_ref.shape[0]

    # permute(1,0,2)+flatten(1) followed by x @ W1 is exactly
    # sum_s hs[s] @ W1[s*dff:(s+1)*dff]; seq is tiny and static, so unroll it
    # fully and keep the f32 accumulator in vregs (no VMEM scratch RMW).
    acc = jnp.dot(hs_ref[0], w1_ref[0], preferred_element_type=jnp.float32)
    for s in range(1, seq):
        acc = acc + jnp.dot(hs_ref[s], w1_ref[s],
                            preferred_element_type=jnp.float32)

    # Layer-1 bias + exact sigmoid (runs once per batch tile; EUP cost is
    # negligible, so no approx reciprocal).
    h = 1.0 / (1.0 + jnp.exp(-(acc + b1_ref[...])))

    # TODO(synk): training-mode dropout (PRNG mask + 1/(1-p) rescale) not
    # implemented; eval-mode dropout is the identity.

    # Layer 2: bf16 operands, f32 accumulation, lane-dense store.
    o = jnp.dot(h.astype(w2_ref.dtype), w2_ref[...],
                preferred_element_type=jnp.float32)
    o_ref[...] = (o + b2_ref[...]).astype(o_ref.dtype)


@functools.partial(jax.jit, static_argnames=("tile_b",))
def fc_decoder_forward(hs, w1, b1, w2, b2, *, tile_b=None):
    """hs: (input_num, batch, dim_feedforward)  ->  (batch, num_class)."""
    seq, batch, dff = hs.shape
    d_in, hidden = w1.shape
    assert d_in == seq * dff, "W1 fan-in must equal input_num * dim_feedforward"
    num_class = w2.shape[1]

    # Only the output's lane dim is padded (lane-dense store). hidden is kept
    # at its true extent: full-array-dim blocks are legal and padding it would
    # just waste HBM/VMEM bandwidth.
    ncls_pad = _round_up(num_class, 128)

    cdt = jnp.bfloat16  # streamed-operand dtype; accumulation stays f32
    hs_c = hs.astype(cdt)
    w1r = w1.reshape(seq, dff, hidden).astype(cdt)
    b1r = b1.reshape(1, hidden).astype(jnp.float32)
    w2p = jnp.zeros((hidden, ncls_pad), cdt).at[:, :num_class].set(w2.astype(cdt))
    b2p = jnp.zeros((1, ncls_pad), jnp.float32).at[:, :num_class].set(b2)

    # Batch tiling: aim for >=2 tiles so v7x's two TensorCores both get work,
    # keep the tile sublane-aligned (16 rows for bf16 packing), cap at 512.
    if tile_b is None:
        half = _round_up(max(pl.cdiv(batch, 2), 1), 16)
        if half >= batch:
            tile_b = _round_up(batch, 8)   # single tile == full (padded) batch
        else:
            tile_b = min(512, half)
    batch_pad = _round_up(batch, tile_b)
    if batch_pad != batch:
        hs_c = jnp.pad(hs_c, ((0, 0), (0, batch_pad - batch), (0, 0)))
    n_btiles = batch_pad // tile_b

    # Explicit VMEM budget: double-buffered streamed blocks + resident weights.
    vmem_bytes = (2 * seq * tile_b * dff * 2        # hs tiles (bf16, 2 bufs)
                  + 2 * tile_b * ncls_pad * 4       # out tiles (f32, 2 bufs)
                  + 2 * seq * dff * hidden * 2      # W1 (resident)
                  + 2 * hidden * ncls_pad * 2       # W2 (resident)
                  + 2 * (hidden + ncls_pad) * 4)    # biases
    vmem_limit = int(min(max(2 * vmem_bytes, 16 << 20), 64 << 20))

    flops = (2 * batch_pad * (seq * dff) * hidden
             + 2 * batch_pad * hidden * ncls_pad)
    bytes_accessed = (hs_c.size * 2                 # bf16 activations, read once
                      + w1r.size * 2 + w2p.size * 2  # resident weights, read once
                      + b1r.size * 4 + b2p.size * 4
                      + batch_pad * ncls_pad * 4)   # f32 output, written once

    out = pl.pallas_call(
        fc_decoder_kernel,
        out_shape=jax.ShapeDtypeStruct((batch_pad, ncls_pad), jnp.float32),
        grid_spec=pltpu.PrefetchScalarGridSpec(
            num_scalar_prefetch=0,
            grid=(n_btiles,),
            in_specs=[
                pl.BlockSpec((seq, tile_b, dff), lambda i: (0, i, 0)),
                pl.BlockSpec((seq, dff, hidden), lambda i: (0, 0, 0)),
                pl.BlockSpec((1, hidden), lambda i: (0, 0)),
                pl.BlockSpec((hidden, ncls_pad), lambda i: (0, 0)),
                pl.BlockSpec((1, ncls_pad), lambda i: (0, 0)),
            ],
            out_specs=pl.BlockSpec((tile_b, ncls_pad), lambda i: (i, 0)),
        ),
        compiler_params=pltpu.CompilerParams(
            dimension_semantics=("parallel",),
            vmem_limit_bytes=vmem_limit),
        cost_estimate=pl.CostEstimate(
            flops=flops,
            transcendentals=batch_pad * hidden,
            bytes_accessed=bytes_accessed),
    )(hs_c, w1r, b1r, w2p, b2p)

    # Strip batch and lane padding.
    return out[:batch, :num_class]


def init_params(key, dim_feedforward, num_class, input_num):
    d_in = dim_feedforward * input_num
    hidden = dim_feedforward // input_num
    k1, k2, k3, k4 = jax.random.split(key, 4)
    # PyTorch-Linear-like uniform init: U(-1/sqrt(fan_in), 1/sqrt(fan_in))
    lim1 = 1.0 / jnp.sqrt(d_in)
    lim2 = 1.0 / jnp.sqrt(hidden)
    w1 = jax.random.uniform(k1, (d_in, hidden), jnp.float32, -lim1, lim1)
    b1 = jax.random.uniform(k2, (hidden,), jnp.float32, -lim1, lim1)
    w2 = jax.random.uniform(k3, (hidden, num_class), jnp.float32, -lim2, lim2)
    b2 = jax.random.uniform(k4, (num_class,), jnp.float32, -lim2, lim2)
    return w1, b1, w2, b2


if __name__ == "__main__":
    # Small shapes consistent with the module.
    input_num = 3
    dim_feedforward = 48          # hidden = 48 // 3 = 16
    num_class = 10
    batch = 8

    key = jax.random.PRNGKey(0)
    k_x, k_p = jax.random.split(key)
    hs = jax.random.normal(k_x, (input_num, batch, dim_feedforward), jnp.float32)
    w1, b1, w2, b2 = init_params(k_p, dim_feedforward, num_class, input_num)

    out = fc_decoder_forward(hs, w1, b1, w2, b2)
    out = jax.block_until_ready(out)
    assert out.shape == (batch, num_class)

    # Reference 1: full-f32 PyTorch-equivalent forward. Tolerance loosened
    # because the kernel streams bf16 operands (f32 accumulation).
    x = jnp.transpose(hs, (1, 0, 2)).reshape(batch, -1)
    h32 = jax.nn.sigmoid(x @ w1 + b1)
    ref32 = h32 @ w2 + b2
    assert jnp.allclose(out, ref32, atol=3e-2, rtol=3e-2), (
        float(jnp.max(jnp.abs(out - ref32))))

    # Reference 2: same bf16-operand / f32-accumulate policy as the kernel
    # (tighter check on the kernel's math itself).
    hbf = 1.0 / (1.0 + jnp.exp(-(jnp.dot(x.astype(jnp.bfloat16),
                                         w1.astype(jnp.bfloat16),
                                         preferred_element_type=jnp.float32)
                                 + b1)))
    refbf = jnp.dot(hbf.astype(jnp.bfloat16), w2.astype(jnp.bfloat16),
                    preferred_element_type=jnp.float32) + b2
    assert jnp.allclose(out, refbf, atol=5e-3, rtol=5e-3), (
        float(jnp.max(jnp.abs(out - refbf))))

    print("KERNEL_OK")
</pallas_src>

<mosaic_0001>
module attributes {stable_mosaic.version = 11 : i64} {
  func.func @fc_decoder_kernel(%arg0: i32, %arg1: memref<3x8x48xbf16, #tpu.memory_space<vmem>>, %arg2: memref<3x48x16xbf16, #tpu.memory_space<vmem>>, %arg3: memref<1x16xf32, #tpu.memory_space<vmem>>, %arg4: memref<16x128xbf16, #tpu.memory_space<vmem>>, %arg5: memref<1x128xf32, #tpu.memory_space<vmem>>, %arg6: memref<8x128xf32, #tpu.memory_space<vmem>>) attributes {dimension_semantics = [#tpu.dimension_semantics<parallel>], iteration_bounds = array<i64: 1>, scalar_prefetch = 0 : i64, scratch_operands = 0 : i64, tpu.core_type = #tpu.core_type<tc>, window_params = [{transform_indices = @transform_0, window_bounds = array<i64: 3, 8, 48>}, {pipeline_mode = #tpu.pipeline_mode<synchronous>, transform_indices = @transform_1, window_bounds = array<i64: 3, 48, 16>}, {pipeline_mode = #tpu.pipeline_mode<synchronous>, transform_indices = @transform_2, window_bounds = array<i64: 1, 16>}, {pipeline_mode = #tpu.pipeline_mode<synchronous>, transform_indices = @transform_3, window_bounds = array<i64: 16, 128>}, {pipeline_mode = #tpu.pipeline_mode<synchronous>, transform_indices = @transform_4, window_bounds = array<i64: 1, 128>}, {transform_indices = @transform_5, window_bounds = array<i64: 8, 128>}]} {
    %c0 = arith.constant 0 : index
    %c0_0 = arith.constant 0 : index
    %c0_1 = arith.constant 0 : index
    %0 = vector.load %arg1[%c0, %c0_0, %c0_1] : memref<3x8x48xbf16, #tpu.memory_space<vmem>>, vector<1x8x48xbf16>
    %1 = vector.shape_cast %0 : vector<1x8x48xbf16> to vector<8x48xbf16>
    %c0_2 = arith.constant 0 : index
    %c0_3 = arith.constant 0 : index
    %c0_4 = arith.constant 0 : index
    %2 = vector.load %arg2[%c0_2, %c0_3, %c0_4] : memref<3x48x16xbf16, #tpu.memory_space<vmem>>, vector<1x48x16xbf16>
    %3 = vector.shape_cast %2 : vector<1x48x16xbf16> to vector<48x16xbf16>
    %cst = arith.constant dense<0.000000e+00> : vector<8x16xf32>
    %4 = tpu.matmul %1, %3, %cst {dimension_numbers = #tpu.dot_dimension_numbers<[1], [0], [0], [1], [0, 0, 1, 1], [], []>} : vector<8x48xbf16>, vector<48x16xbf16>, vector<8x16xf32> -> vector<8x16xf32>
    %c1 = arith.constant 1 : index
    %c0_5 = arith.constant 0 : index
    %c0_6 = arith.constant 0 : index
    %5 = vector.load %arg1[%c1, %c0_5, %c0_6] : memref<3x8x48xbf16, #tpu.memory_space<vmem>>, vector<1x8x48xbf16>
    %6 = vector.shape_cast %5 : vector<1x8x48xbf16> to vector<8x48xbf16>
    %c1_7 = arith.constant 1 : index
    %c0_8 = arith.constant 0 : index
    %c0_9 = arith.constant 0 : index
    %7 = vector.load %arg2[%c1_7, %c0_8, %c0_9] : memref<3x48x16xbf16, #tpu.memory_space<vmem>>, vector<1x48x16xbf16>
    %8 = vector.shape_cast %7 : vector<1x48x16xbf16> to vector<48x16xbf16>
    %cst_10 = arith.constant dense<0.000000e+00> : vector<8x16xf32>
    %9 = tpu.matmul %6, %8, %cst_10 {dimension_numbers = #tpu.dot_dimension_numbers<[1], [0], [0], [1], [0, 0, 1, 1], [], []>} : vector<8x48xbf16>, vector<48x16xbf16>, vector<8x16xf32> -> vector<8x16xf32>
    %10 = arith.addf %4, %9 : vector<8x16xf32>
    %c2 = arith.constant 2 : index
    %c0_11 = arith.constant 0 : index
    %c0_12 = arith.constant 0 : index
    %11 = vector.load %arg1[%c2, %c0_11, %c0_12] : memref<3x8x48xbf16, #tpu.memory_space<vmem>>, vector<1x8x48xbf16>
    %12 = vector.shape_cast %11 : vector<1x8x48xbf16> to vector<8x48xbf16>
    %c2_13 = arith.constant 2 : index
    %c0_14 = arith.constant 0 : index
    %c0_15 = arith.constant 0 : index
    %13 = vector.load %arg2[%c2_13, %c0_14, %c0_15] : memref<3x48x16xbf16, #tpu.memory_space<vmem>>, vector<1x48x16xbf16>
    %14 = vector.shape_cast %13 : vector<1x48x16xbf16> to vector<48x16xbf16>
    %cst_16 = arith.constant dense<0.000000e+00> : vector<8x16xf32>
    %15 = tpu.matmul %12, %14, %cst_16 {dimension_numbers = #tpu.dot_dimension_numbers<[1], [0], [0], [1], [0, 0, 1, 1], [], []>} : vector<8x48xbf16>, vector<48x16xbf16>, vector<8x16xf32> -> vector<8x16xf32>
    %16 = arith.addf %10, %15 : vector<8x16xf32>
    %c0_17 = arith.constant 0 : index
    %c0_18 = arith.constant 0 : index
    %17 = vector.load %arg3[%c0_17, %c0_18] : memref<1x16xf32, #tpu.memory_space<vmem>>, vector<1x16xf32>
    %18 = vector.broadcast %17 : vector<1x16xf32> to vector<8x16xf32>
    %19 = arith.addf %16, %18 : vector<8x16xf32>
    %cst_19 = arith.constant 0.000000e+00 : f32
    %20 = vector.broadcast %cst_19 : f32 to vector<8x16xf32>
    %21 = arith.subf %20, %19 : vector<8x16xf32>
    %22 = math.exp %21 : vector<8x16xf32>
    %cst_20 = arith.constant 1.000000e+00 : f32
    %23 = vector.broadcast %cst_20 : f32 to vector<8x16xf32>
    %24 = arith.addf %23, %22 : vector<8x16xf32>
    %cst_21 = arith.constant 1.000000e+00 : f32
    %25 = vector.broadcast %cst_21 : f32 to vector<8x16xf32>
    %26 = arith.divf %25, %24 : vector<8x16xf32>
    %27 = arith.truncf %26 : vector<8x16xf32> to vector<8x16xbf16>
    %c0_22 = arith.constant 0 : index
    %c0_23 = arith.constant 0 : index
    %28 = vector.load %arg4[%c0_22, %c0_23] : memref<16x128xbf16, #tpu.memory_space<vmem>>, vector<16x128xbf16>
    %cst_24 = arith.constant dense<0.000000e+00> : vector<8x128xf32>
    %29 = tpu.matmul %27, %28, %cst_24 {dimension_numbers = #tpu.dot_dimension_numbers<[1], [0], [0], [1], [0, 0, 1, 1], [], []>} : vector<8x16xbf16>, vector<16x128xbf16>, vector<8x128xf32> -> vector<8x128xf32>
    %c0_25 = arith.constant 0 : index
    %c0_26 = arith.constant 0 : index
    %30 = vector.load %arg5[%c0_25, %c0_26] : memref<1x128xf32, #tpu.memory_space<vmem>>, vector<1x128xf32>
    %31 = vector.broadcast %30 : vector<1x128xf32> to vector<8x128xf32>
    %32 = arith.addf %29, %31 : vector<8x128xf32>
    %c0_27 = arith.constant 0 : index
    %c0_28 = arith.constant 0 : index
    %33 = vector.load %arg6[%c0_27, %c0_28] : memref<8x128xf32, #tpu.memory_space<vmem>>, vector<8x128xf32>
    tpu.vector_store %arg6[%c0_27, %c0_28], %32 {strides = array<i32>} : memref<8x128xf32, #tpu.memory_space<vmem>>, vector<8x128xf32>,
    return
  }
  func.func @transform_0(%arg0: i32) -> (i32, i32, i32) {
    %c0_i32 = arith.constant 0 : i32
    %c0_i32_0 = arith.constant 0 : i32
    %c0_i32_1 = arith.constant 0 : i32
    return %c0_i32, %arg0, %c0_i32_0 : i32, i32, i32
  }
  func.func @transform_1(%arg0: i32) -> (i32, i32, i32) {
    %c0_i32 = arith.constant 0 : i32
    %c0_i32_0 = arith.constant 0 : i32
    %c0_i32_1 = arith.constant 0 : i32
    %c0_i32_2 = arith.constant 0 : i32
    return %c0_i32, %c0_i32_0, %c0_i32_1 : i32, i32, i32
  }
  func.func @transform_2(%arg0: i32) -> (i32, i32) {
    %c0_i32 = arith.constant 0 : i32
    %c0_i32_0 = arith.constant 0 : i32
    %c0_i32_1 = arith.constant 0 : i32
    return %c0_i32, %c0_i32_0 : i32, i32
  }
  func.func @transform_3(%arg0: i32) -> (i32, i32) {
    %c0_i32 = arith.constant 0 : i32
    %c0_i32_0 = arith.constant 0 : i32
    %c0_i32_1 = arith.constant 0 : i32
    return %c0_i32, %c0_i32_0 : i32, i32
  }
  func.func @transform_4(%arg0: i32) -> (i32, i32) {
    %c0_i32 = arith.constant 0 : i32
    %c0_i32_0 = arith.constant 0 : i32
    %c0_i32_1 = arith.constant 0 : i32
    return %c0_i32, %c0_i32_0 : i32, i32
  }
  func.func @transform_5(%arg0: i32) -> (i32, i32) {
    %c0_i32 = arith.constant 0 : i32
    %c0_i32_0 = arith.constant 0 : i32
    return %arg0, %c0_i32 : i32, i32
  }
}

</mosaic_0001>

<llo_original>
// kernel: fc_decoder_forward.1
$region0: #{fc_decoder_forward.1}
  #allocation0 [shape = 'u32[]', space=smem, size = 0x4, offset = 0x4, fixed_abs, tag = 'smem constant byte address 0x4 - core index']
  #allocation1 [shape = 'u32[72,128]{1,0:T(1,128)}', space=vmem, size = 0x9000, scoped, tag = 'internal scratch']
  %s0 = inlined_call_operand.vmem [shape: bf16[3,8,48], index: 0, kind: input, shape index: {}]
  %s1 = inlined_call_operand.vmem [shape: bf16[3,48,16], index: 1, kind: input, shape index: {}]
  %s2 = inlined_call_operand.vmem [shape: f32[1,16], index: 2, kind: input, shape index: {}]
  %s3 = inlined_call_operand.vmem [shape: bf16[16,128], index: 3, kind: input, shape index: {}]
  %s4 = inlined_call_operand.vmem [shape: f32[1,128], index: 4, kind: input, shape index: {}]
  %s5 = inlined_call_operand.hbm [shape: f32[8,128], index: 5, kind: output, shape index: {}]
  %s6 = sld [smem:[#allocation0]]
  $region30: #{fc_decoder_forward.1} parent=0
    _
  %s8 = ssub.s32 1, %s6
  %s9 = scalar_select 0, %s8, %s6
  $region1: #{fc_decoder_forward.1} parent=0
    #allocation2 [shape = 'u8[4096]{0}', space=vmem, size = 0x1000, scoped, tag = 'output window, operand 0, single buffered']
    #allocation3 [shape = 's32[1]{0}', space=sflag, size = 0x4, scoped, tag = 'scoped memory for fc_decoder_forward.1']
    %10 = vsyncpa [#allocation3], 0
    // Predicated region
    $region2: #{fc_decoder_forward.1} parent=1 // pred_check
      _
    $region3: #{fc_decoder_forward.1} parent=1 // pred_check_branch
      %12 = sbr.rel (0) target = $region5
    $region4: #{fc_decoder_forward.1} parent=1 // pred_region
      _
    $region5: #{fc_decoder_forward.1} parent=1 // pred_fallthru
      _
    // Predicated region
    $region6: #{fc_decoder_forward.1} parent=1 // pred_check
      _
    $region7: #{fc_decoder_forward.1} parent=1 // pred_check_branch
      %14 = sbr.rel (0) target = $region9
    $region8: #{fc_decoder_forward.1} parent=1 // pred_region
      _
    $region9: #{fc_decoder_forward.1} parent=1 // pred_fallthru
      _
    // Predicated region
    $region10: #{fc_decoder_forward.1} parent=1 // pred_check
      _
    $region11: #{fc_decoder_forward.1} parent=1 // pred_check_branch
      %16 = sbr.rel (0) target = $region13
    $region12: #{fc_decoder_forward.1} parent=1 // pred_region
      _
    $region13: #{fc_decoder_forward.1} parent=1 // pred_fallthru
      _
    // Predicated region
    $region14: #{fc_decoder_forward.1} parent=1 // pred_check
      _
    $region15: #{fc_decoder_forward.1} parent=1 // pred_check_branch
      %18 = sbr.rel (0) target = $region17
    $region16: #{fc_decoder_forward.1} parent=1 // pred_region
      _
    $region17: #{fc_decoder_forward.1} parent=1 // pred_fallthru
      _
    // Predicated region
    $region18: #{fc_decoder_forward.1} parent=1 // pred_check
      _
    $region19: #{fc_decoder_forward.1} parent=1 // pred_check_branch
      %20 = sbr.rel (0) target = $region21
    $region20: #{fc_decoder_forward.1} parent=1 // pred_region
      _
    $region21: #{fc_decoder_forward.1} parent=1 // pred_fallthru
      _
    %v22 = vld [vmem:[%s0] sm:$0xf]
    %v23 = vld [vmem:[%s1] sm:$0xf]
    %v24 = vld [vmem:[%s1 + $0x4] sm:$0xf]
    %v25 = vld [vmem:[%s1 + $0x8] sm:$0xf]
    %v26 = vld [vmem:[%s1 + $0xc] sm:$0xf]
    %v27 = vld [vmem:[%s1 + $0x10] sm:$0xf]
    %v28 = vld [vmem:[%s1 + $0x14] sm:$0xf]
    %s29 = scalar_lea.vmem %s0, 4
    %v30 = vld [vmem:[%s29] sm:$0xf]
    %s31 = scalar_lea.vmem %s1, 24
    %v32 = vld [vmem:[%s31] sm:$0xf]
    %v33 = vld [vmem:[%s31 + $0x4] sm:$0xf]
    %v34 = vld [vmem:[%s31 + $0x8] sm:$0xf]
    %v35 = vld [vmem:[%s31 + $0xc] sm:$0xf]
    %v36 = vld [vmem:[%s31 + $0x10] sm:$0xf]
    %v37 = vld [vmem:[%s31 + $0x14] sm:$0xf]
    %v44 = vunpack.c.l.b16 %v32
    %v45 = vunpack.c.l.b16 %v33
    %v46 = vunpack.c.l.b16 %v34
    %v47 = vunpack.c.l.b16 %v35
    %v48 = vunpack.c.l.b16 %v36
    %v49 = vunpack.c.l.b16 %v37
    %v50 = vpack.c.b16 %v45, %v44
    %v51 = vpack.c.b16 %v47, %v46
    %v52 = vpack.c.b16 %v49, %v48
    %vm56 = vcmask 392192
    %v58 = vsel %vm56, %v30, 0
    %60 = vmatpush.bf16.msra.mxu0 0
    %61 = vmatpush.bf16.msra.mxu0 0
    %62 = vmatpush.bf16.msra.mxu0 0
    %63 = vmatpush.bf16.msra.mxu0 0
    %64 = vmatpush.bf16.msra.mxu0 0
    %65 = vmatpush.bf16.msra.mxu0 %v52
    %66 = vmatpush.bf16.msra.mxu0 %v51
    %67 = vmatpush.bf16.msra.mxu0 %v50
    %68 = vmatmul.bf16.gmra.mxu0 %v58
    %v69 = vpop.f32.mrf.mxu0
    %v70 = vadd.f32 0.0, %v69
    %v71 = vpop.f32.mrf.mxu0
    %72 = vdwg.mxu0
    %v79 = vunpack.c.l.b16 %v23
    %v80 = vunpack.c.l.b16 %v24
    %v81 = vunpack.c.l.b16 %v25
    %v82 = vunpack.c.l.b16 %v26
    %v83 = vunpack.c.l.b16 %v27
    %v84 = vunpack.c.l.b16 %v28
    %v85 = vpack.c.b16 %v80, %v79
    %v86 = vpack.c.b16 %v82, %v81
    %v87 = vpack.c.b16 %v84, %v83
    %v92 = vsel %vm56, %v22, 0
    %94 = vmatpush.bf16.msra.mxu0 0
    %95 = vmatpush.bf16.msra.mxu0 0
    %96 = vmatpush.bf16.msra.mxu0 0
    %97 = vmatpush.bf16.msra.mxu0 0
    %98 = vmatpush.bf16.msra.mxu0 0
    %99 = vmatpush.bf16.msra.mxu0 %v87
    %100 = vmatpush.bf16.msra.mxu0 %v86
    %101 = vmatpush.bf16.msra.mxu0 %v85
    %102 = vmatmul.bf16.gmra.mxu0 %v92
    %v103 = vpop.f32.mrf.mxu0
    %v104 = vadd.f32 %v70, %v103
    %v105 = vpop.f32.mrf.mxu0
    %106 = vdwg.mxu0
    %s107 = scalar_lea.vmem %s0, 8
    %v108 = vld [vmem:[%s107] sm:$0xf]
    %s109 = scalar_lea.vmem %s1, 48
    %v110 = vld [vmem:[%s109] sm:$0xf]
    %v111 = vld [vmem:[%s109 + $0x4] sm:$0xf]
    %v112 = vld [vmem:[%s109 + $0x8] sm:$0xf]
    %v113 = vld [vmem:[%s109 + $0xc] sm:$0xf]
    %v114 = vld [vmem:[%s109 + $0x10] sm:$0xf]
    %v115 = vld [vmem:[%s109 + $0x14] sm:$0xf]
    %v122 = vunpack.c.l.b16 %v110
    %v123 = vunpack.c.l.b16 %v111
    %v124 = vunpack.c.l.b16 %v112
    %v125 = vunpack.c.l.b16 %v113
    %v126 = vunpack.c.l.b16 %v114
    %v127 = vunpack.c.l.b16 %v115
    %v128 = vpack.c.b16 %v123, %v122
    %v129 = vpack.c.b16 %v125, %v124
    %v130 = vpack.c.b16 %v127, %v126
    %v135 = vsel %vm56, %v108, 0
    %137 = vmatpush.bf16.msra.mxu0 0
    %138 = vmatpush.bf16.msra.mxu0 0
    %139 = vmatpush.bf16.msra.mxu0 0
    %140 = vmatpush.bf16.msra.mxu0 0
    %141 = vmatpush.bf16.msra.mxu0 0
    %142 = vmatpush.bf16.msra.mxu0 %v130
    %143 = vmatpush.bf16.msra.mxu0 %v129
    %144 = vmatpush.bf16.msra.mxu0 %v128
    %145 = vmatmul.bf16.gmra.mxu0 %v135
    %v146 = vpop.f32.mrf.mxu0
    %v147 = vadd.f32 0.0, %v146
    %v148 = vpop.f32.mrf.mxu0
    %149 = vdwg.mxu0
    %v150 = vadd.f32 %v104, %v147
    %v151 = vld [vmem:[%s2] sm:$0x1]
    %v153 = vperm.slane %v151, 0
    %v155 = vadd.f32 %v150, %v153
    %v156 = vsub.f32 0.0, %v155
    %v157 = vmul.f32 %v156, 1.442695
    %v158 = vpow.pop %v157
    %v159 = vadd.f32 %v158, 1.0
    %v160 = vrcp.pop %v159
    %v161 = vmul.f32 %v159, %v160
    %v162 = vsub.f32 1.0, %v161
    %v163 = vmul.f32 %v160, %v162
    %v164 = vadd.f32 %v160, %v163
    %vm165 = vweird.f32 %v159
    %vm166 = vweird.f32 %v160
    %vm167 = vmor %vm165, %vm166
    %v168 = vsel %vm167, %v160, %v164
    %v169 = vand.u32 2147483647, %v159
    %vm170 = vcmp.eq.f32.partialorder %v169, 8.507059e+37
    %v171 = vand.u32 %v159, 2147483648
    %v172 = vor.u32 1.1754944e-38, %v171
    %v173 = vsel %vm170, %v172, %v168
    %v174 = vmul.f32 1.0, %v173
    %v175 = vpack.c.bf16 %v174, %v174
    %v176 = vld [vmem:[%s3] sm:$0xf]
    %v177 = vld [vmem:[%s3 + $0x4] sm:$0xf]
    %v178 = vld [vmem:[%s4] sm:$0x1]
    %v180 = vperm.slane %v178, 0
    %v184 = vunpack.c.l.b16 %v176
    %v185 = vunpack.c.l.b16 %v177
    %v186 = vpack.c.b16 %v185, %v184
    %vm188 = vcmask 130048
    %v190 = vsel %vm188, %v175, 0
    %192 = vmatpush.bf16.msra.mxu0 0
    %193 = vmatpush.bf16.msra.mxu0 0
    %194 = vmatpush.bf16.msra.mxu0 0
    %195 = vmatpush.bf16.msra.mxu0 0
    %196 = vmatpush.bf16.msra.mxu0 0
    %197 = vmatpush.bf16.msra.mxu0 0
    %198 = vmatpush.bf16.msra.mxu0 0
    %199 = vmatpush.bf16.msra.mxu0 %v186
    %200 = vmatmul.bf16.gmra.mxu0 %v190
    %v201 = vpop.f32.mrf.mxu0
    %v202 = vadd.f32 %v180, %v201
    %v203 = vpop.f32.mrf.mxu0
    %204 = vdwg.mxu0
    %205 = vst [vmem:[#allocation2] sm:$0xff] %v202
    // Predicated region
    $region22: #{fc_decoder_forward.1} parent=1 // pred_check
      _
    $region23: #{fc_decoder_forward.1} parent=1 // pred_check_branch
      %207 = sbr.rel (0) target = $region25
    $region24: #{fc_decoder_forward.1} parent=1 // pred_region
      %209 = vsyncadd [#allocation3], 0
      %s211 = sshll.u32 [#allocation2], 4
      %s212 = int_to_ptr.vmem [resolvable:$true] %s211
      %s213 = sshll.u32 %s5, 4
      %s214 = int_to_ptr.hbm [resolvable:$true] %s213
      %216 = dma.vmem_to_hbm [thread:$0]  %s212, 128, %s214, [#allocation3]
    $region25: #{fc_decoder_forward.1} parent=1 // pred_fallthru
      _
    // Predicated region
    $region26: #{fc_decoder_forward.1} parent=1 // pred_check
      _
    $region27: #{fc_decoder_forward.1} parent=1 // pred_check_branch
      %218 = sbr.rel (0) target = $region29
    $region28: #{fc_decoder_forward.1} parent=1 // pred_region
      %220 = dma.done [#allocation3], 128
    $region29: #{fc_decoder_forward.1} parent=1 // pred_fallthru
      _
    %221 = vsyncpa [#allocation3], 1

</llo_original>
